<compile_context>
chip_gen: v7x
topology: tpu7x:2x2x1
jax: 0.10.0
libtpu: 0.0.40
codegen_flags: <defaults>
</compile_context>

<pallas_src>
import functools

import jax
import jax.numpy as jnp
from jax.experimental import pallas as pl
from jax.experimental.pallas import tpu as pltpu


def _round_up(v, m):
    return (v + m - 1) // m * m


def app_kernel(x_ref, w_ref, b_ref, p_ref, o_ref):
    # One-time embedding: (N_pad, f_in_pad) @ (f_in_pad, F_pad) + (1, F_pad).
    emb = (
        jnp.dot(x_ref[...], w_ref[...], preferred_element_type=jnp.float32)
        + b_ref[...]
    )
    # Collapsed depth-loop propagation: out = P @ emb, then ReLU.
    # (P's padded rows/cols are zero, so padded-row garbage in emb — coming from
    #  the bias broadcast — never reaches the valid output region.)
    out = jnp.dot(p_ref[...], emb, preferred_element_type=jnp.float32)
    o_ref[...] = jnp.maximum(out, 0.0).astype(o_ref.dtype)


def app_forward(x, w, b, adj, *, depth=10, teleport=0.5):
    """x: (N, f_in) node features; w: (f_in, f_out); b: (f_out,) or (1, f_out);
    adj: (N, N) dense 0/1 adjacency (no self loops)."""
    n, f_in = x.shape
    f_out = w.shape[1]

    # Pad everything to full (8,128) tiles: rows AND contraction dims to 128 so
    # every vld is unmasked and every MXU push contracts a full K.
    n_pad = _round_up(n, 128)
    f_in_pad = _round_up(f_in, 128)
    f_out_pad = _round_up(f_out, 128)

    x_p = jnp.zeros((n_pad, f_in_pad), jnp.float32).at[:n, :f_in].set(
        x.astype(jnp.float32)
    )
    w_p = jnp.zeros((f_in_pad, f_out_pad), jnp.float32).at[:f_in, :f_out].set(
        w.astype(jnp.float32)
    )
    b_p = jnp.zeros((1, f_out_pad), jnp.float32).at[:, :f_out].set(
        jnp.reshape(b, (1, f_out)).astype(jnp.float32)
    )

    # One-time (per adjacency) propagation-operator construction, done in the
    # wrapper with plain XLA:
    #   M = (1 - teleport) * (I - D^{-1} A)
    #   P = M^depth + teleport * (I + M + ... + M^(depth-1))      (Horner)
    # so that the depth loop disappears from the kernel entirely:
    #   out_depth = P @ embedding.
    adj = adj.astype(jnp.float32)
    deg = jnp.maximum(jnp.sum(adj, axis=1, keepdims=True), 1.0)  # isolated-node safe
    dinv = 1.0 / deg
    eye = jnp.eye(n, dtype=jnp.float32)
    m_core = (1.0 - teleport) * (eye - dinv * adj)
    p_core = eye                                   # P_0 = I  (out_0 = emb)
    for _ in range(int(depth)):                    # P_{t+1} = M @ P_t + teleport * I
        p_core = m_core @ p_core + teleport * eye
    p_pad = jnp.zeros((n_pad, n_pad), jnp.float32).at[:n, :n].set(p_core)

    flops = 2.0 * n_pad * f_in_pad * f_out_pad + 2.0 * n_pad * n_pad * f_out_pad
    bytes_accessed = 4 * (
        n_pad * f_in_pad + f_in_pad * f_out_pad + f_out_pad
        + n_pad * n_pad + n_pad * f_out_pad
    )

    out_p = pl.pallas_call(
        app_kernel,
        out_shape=jax.ShapeDtypeStruct((n_pad, f_out_pad), jnp.float32),
        # No grid: single invocation, whole arrays VMEM-resident.
        in_specs=[
            pl.BlockSpec(memory_space=pltpu.MemorySpace.VMEM),  # x
            pl.BlockSpec(memory_space=pltpu.MemorySpace.VMEM),  # w
            pl.BlockSpec(memory_space=pltpu.MemorySpace.VMEM),  # b
            pl.BlockSpec(memory_space=pltpu.MemorySpace.VMEM),  # P
        ],
        out_specs=pl.BlockSpec(memory_space=pltpu.MemorySpace.VMEM),
        compiler_params=pltpu.CompilerParams(
            # Explicit scoped-VMEM budget: load-bearing on v5e (16 MiB default),
            # comfortably under the v7x 64 MiB physical cap, far above the
            # footprint at these sizes. Raise per generation when scaling N.
            vmem_limit_bytes=32 * 1024 * 1024,
        ),
        cost_estimate=pl.CostEstimate(
            flops=int(flops), transcendentals=0, bytes_accessed=int(bytes_accessed)
        ),
    )(x_p, w_p, b_p, p_pad)
    return out_p[:n, :f_out]


def app_reference(x, w, b, adj, *, depth=10, teleport=0.5):
    """Pure-JAX reference following the original PyTorch loop structure."""
    deg = jnp.maximum(jnp.sum(adj, axis=1, keepdims=True), 1.0)
    dinv = 1.0 / deg
    emb = x @ w + jnp.reshape(b, (1, -1))
    out = emb
    for _ in range(depth):
        out = (1.0 - teleport) * (out - dinv * (adj @ out))
        out = out + teleport * emb
    return jnp.maximum(out, 0.0)


if __name__ == "__main__":
    key = jax.random.PRNGKey(0)
    k_x, k_w, k_b, k_adj = jax.random.split(key, 4)

    N = 16        # number of graph nodes
    IN_SIZE = 32
    OUT_SIZE = 64
    DEPTH = 10
    TELEPORT = 0.5

    # node features
    x = jax.random.normal(k_x, (N, IN_SIZE), dtype=jnp.float32)

    # Linear params, PyTorch-style uniform(-1/sqrt(in), 1/sqrt(in)) init
    bound = 1.0 / (IN_SIZE ** 0.5)
    w = jax.random.uniform(k_w, (IN_SIZE, OUT_SIZE), jnp.float32, -bound, bound)
    b = jax.random.uniform(k_b, (1, OUT_SIZE), jnp.float32, -bound, bound)

    # synthetic graph "structure": ring edges (deg >= 1 everywhere) + random extra
    # edges, no self loops.
    ring = jnp.zeros((N, N), jnp.float32)
    idx = jnp.arange(N)
    ring = ring.at[idx, (idx + 1) % N].set(1.0)
    ring = ring.at[idx, (idx - 1) % N].set(1.0)
    rand_edges = (jax.random.uniform(k_adj, (N, N)) < 0.2).astype(jnp.float32)
    adj = jnp.clip(ring + rand_edges, 0.0, 1.0)
    adj = adj * (1.0 - jnp.eye(N, dtype=jnp.float32))

    out = app_forward(x, w, b, adj, depth=DEPTH, teleport=TELEPORT)
    out = jax.block_until_ready(out)

    ref = app_reference(x, w, b, adj, depth=DEPTH, teleport=TELEPORT)
    assert out.shape == (N, OUT_SIZE)
    assert jnp.allclose(out, ref, atol=1e-4, rtol=1e-4), (
        float(jnp.max(jnp.abs(out - ref)))
    )

    print("KERNEL_OK")
</pallas_src>

<mosaic_0001>
module attributes {stable_mosaic.version = 11 : i64} {
  func.func @app_kernel(%arg0: memref<128x128xf32, #tpu.memory_space<vmem>>, %arg1: memref<128x128xf32, #tpu.memory_space<vmem>>, %arg2: memref<1x128xf32, #tpu.memory_space<vmem>>, %arg3: memref<128x128xf32, #tpu.memory_space<vmem>>, %arg4: memref<128x128xf32, #tpu.memory_space<vmem>>) attributes {dimension_semantics = [], scalar_prefetch = 0 : i64, scratch_operands = 0 : i64, tpu.core_type = #tpu.core_type<tc>} {
    %c0 = arith.constant 0 : index
    %c0_0 = arith.constant 0 : index
    %0 = vector.load %arg0[%c0, %c0_0] : memref<128x128xf32, #tpu.memory_space<vmem>>, vector<128x128xf32>
    %c0_1 = arith.constant 0 : index
    %c0_2 = arith.constant 0 : index
    %1 = vector.load %arg1[%c0_1, %c0_2] : memref<128x128xf32, #tpu.memory_space<vmem>>, vector<128x128xf32>
    %cst = arith.constant dense<0.000000e+00> : vector<128x128xf32>
    %2 = tpu.matmul %0, %1, %cst {dimension_numbers = #tpu.dot_dimension_numbers<[1], [0], [0], [1], [0, 0, 1, 1], [], []>} : vector<128x128xf32>, vector<128x128xf32>, vector<128x128xf32> -> vector<128x128xf32>
    %c0_3 = arith.constant 0 : index
    %c0_4 = arith.constant 0 : index
    %3 = vector.load %arg2[%c0_3, %c0_4] : memref<1x128xf32, #tpu.memory_space<vmem>>, vector<1x128xf32>
    %4 = vector.broadcast %3 : vector<1x128xf32> to vector<128x128xf32>
    %5 = arith.addf %2, %4 : vector<128x128xf32>
    %c0_5 = arith.constant 0 : index
    %c0_6 = arith.constant 0 : index
    %6 = vector.load %arg3[%c0_5, %c0_6] : memref<128x128xf32, #tpu.memory_space<vmem>>, vector<128x128xf32>
    %cst_7 = arith.constant dense<0.000000e+00> : vector<128x128xf32>
    %7 = tpu.matmul %6, %5, %cst_7 {dimension_numbers = #tpu.dot_dimension_numbers<[1], [0], [0], [1], [0, 0, 1, 1], [], []>} : vector<128x128xf32>, vector<128x128xf32>, vector<128x128xf32> -> vector<128x128xf32>
    %cst_8 = arith.constant 0.000000e+00 : f32
    %8 = vector.broadcast %cst_8 : f32 to vector<128x128xf32>
    %9 = arith.maximumf %7, %8 : vector<128x128xf32>
    %c0_9 = arith.constant 0 : index
    %c0_10 = arith.constant 0 : index
    %10 = vector.load %arg4[%c0_9, %c0_10] : memref<128x128xf32, #tpu.memory_space<vmem>>, vector<128x128xf32>
    tpu.vector_store %arg4[%c0_9, %c0_10], %9 {strides = array<i32>} : memref<128x128xf32, #tpu.memory_space<vmem>>, vector<128x128xf32>,
    return
  }
}

</mosaic_0001>

<llo_original>
// kernel: tpu_custom_call.1
$region0: #{tpu_custom_call.1}
  #allocation0 [shape = 'u32[]', space=smem, size = 0x4, offset = 0x4, fixed_abs, tag = 'smem constant byte address 0x4 - core index']
  #allocation1 [shape = 'u32[144,128]{1,0:T(1,128)}', space=vmem, size = 0x12000, scoped, tag = 'internal scratch']
  %s0 = inlined_call_operand.hbm [shape: f32[128,128], index: 0, kind: input, shape index: {}]
  %s1 = inlined_call_operand.hbm [shape: f32[128,128], index: 1, kind: input, shape index: {}]
  %s2 = inlined_call_operand.vmem [shape: f32[1,128], index: 2, kind: input, shape index: {}]
  %s3 = inlined_call_operand.hbm [shape: f32[128,128], index: 3, kind: input, shape index: {}]
  %s4 = inlined_call_operand.hbm [shape: f32[128,128], index: 4, kind: output, shape index: {}]
  %s5 = sld [smem:[#allocation0]]
  $region38: #{tpu_custom_call.1} parent=0
    _
  %s7 = ssub.s32 1, %s5
  %s8 = scalar_select 0, %s7, %s5
  $region1: #{tpu_custom_call.1} parent=0
    #allocation2 [shape = 'u8[65536]{0}', space=vmem, size = 0x10000, scoped, tag = 'input window, operand 0, single buffered']
    #allocation3 [shape = 's32[1]{0}', space=sflag, size = 0x4, scoped, tag = 'scoped memory for tpu_custom_call.1']
    #allocation4 [shape = 's32[1]{0}', space=sflag, size = 0x4, scoped, tag = 'scoped memory for tpu_custom_call.1']
    #allocation5 [shape = 'u8[65536]{0}', space=vmem, size = 0x10000, scoped, tag = 'input window, operand 1, single buffered']
    #allocation6 [shape = 's32[1]{0}', space=sflag, size = 0x4, scoped, tag = 'scoped memory for tpu_custom_call.1']
    #allocation7 [shape = 'u8[65536]{0}', space=vmem, size = 0x10000, scoped, tag = 'input window, operand 3, single buffered']
    #allocation8 [shape = 'u8[65536]{0}', space=vmem, size = 0x10000, scoped, tag = 'output window, operand 0, single buffered']
    %9 = vsyncpa [#allocation3], 0
    %10 = vsyncpa [#allocation6], 0
    %11 = vsyncpa [#allocation4], 0
    // Predicated region
    $region2: #{tpu_custom_call.1} parent=1 // pred_check
      _
    $region3: #{tpu_custom_call.1} parent=1 // pred_check_branch
      %13 = sbr.rel (0) target = $region5
    $region4: #{tpu_custom_call.1} parent=1 // pred_region
      %s15 = ssub.s32 2048, 2048
      %16 = vsyncadd [#allocation3], %s15
      %s17 = sshll.u32 [#allocation2], 4
      %s18 = int_to_ptr.vmem [resolvable:$true] %s17
      %23 = dma.hbm_to_vmem [thread:$0]  %s0, 2048, %s18, [#allocation3], 128, 128, 8
    $region5: #{tpu_custom_call.1} parent=1 // pred_fallthru
      _
    // Predicated region
    $region6: #{tpu_custom_call.1} parent=1 // pred_check
      _
    $region7: #{tpu_custom_call.1} parent=1 // pred_check_branch
      %25 = sbr.rel (0) target = $region9
    $region8: #{tpu_custom_call.1} parent=1 // pred_region
      %s27 = ssub.s32 2048, 2048
      %28 = vsyncadd [#allocation6], %s27
      %s29 = sshll.u32 [#allocation5], 4
      %s30 = int_to_ptr.vmem [resolvable:$true] %s29
      %35 = dma.hbm_to_vmem [thread:$0]  %s1, 2048, %s30, [#allocation6], 128, 128, 8
    $region9: #{tpu_custom_call.1} parent=1 // pred_fallthru
      _
    // Predicated region
    $region10: #{tpu_custom_call.1} parent=1 // pred_check
      _
    $region11: #{tpu_custom_call.1} parent=1 // pred_check_branch
      %37 = sbr.rel (0) target = $region13
    $region12: #{tpu_custom_call.1} parent=1 // pred_region
      _
    $region13: #{tpu_custom_call.1} parent=1 // pred_fallthru
      _
    // Predicated region
    $region14: #{tpu_custom_call.1} parent=1 // pred_check
      _
    $region15: #{tpu_custom_call.1} parent=1 // pred_check_branch
      %39 = sbr.rel (0) target = $region17
    $region16: #{tpu_custom_call.1} parent=1 // pred_region
      %s41 = ssub.s32 2048, 2048
      %42 = vsyncadd [#allocation6], %s41
      %s43 = sshll.u32 [#allocation7], 4
      %s44 = int_to_ptr.vmem [resolvable:$true] %s43
      %49 = dma.hbm_to_vmem [thread:$0]  %s3, 2048, %s44, [#allocation6], 128, 128, 8
    $region17: #{tpu_custom_call.1} parent=1 // pred_fallthru
      _
    // Predicated region
    $region18: #{tpu_custom_call.1} parent=1 // pred_check
      _
    $region19: #{tpu_custom_call.1} parent=1 // pred_check_branch
      %51 = sbr.rel (0) target = $region21
    $region20: #{tpu_custom_call.1} parent=1 // pred_region
      %52 = dma.done [#allocation3], 2048
    $region21: #{tpu_custom_call.1} parent=1 // pred_fallthru
      _
    // Predicated region
    $region22: #{tpu_custom_call.1} parent=1 // pred_check
      _
    $region23: #{tpu_custom_call.1} parent=1 // pred_check_branch
      %54 = sbr.rel (0) target = $region25
    $region24: #{tpu_custom_call.1} parent=1 // pred_region
      %55 = dma.done [#allocation6], 2048
    $region25: #{tpu_custom_call.1} parent=1 // pred_fallthru
      _
    // Predicated region
    $region26: #{tpu_custom_call.1} parent=1 // pred_check
      _
    $region27: #{tpu_custom_call.1} parent=1 // pred_check_branch
      %57 = sbr.rel (0) target = $region29
    $region28: #{tpu_custom_call.1} parent=1 // pred_region
      %58 = dma.done [#allocation6], 2048
    $region29: #{tpu_custom_call.1} parent=1 // pred_fallthru
      _
    %v59 = vld [vmem:[#allocation2] sm:$0xff]
    %v60 = vld [vmem:[#allocation2 + $0x8] sm:$0xff]
    %v61 = vld [vmem:[#allocation2 + $0x10] sm:$0xff]
    %v62 = vld [vmem:[#allocation2 + $0x18] sm:$0xff]
    %v63 = vld [vmem:[#allocation2 + $0x20] sm:$0xff]
    %v64 = vld [vmem:[#allocation2 + $0x28] sm:$0xff]
    %v65 = vld [vmem:[#allocation2 + $0x30] sm:$0xff]
    %v66 = vld [vmem:[#allocation2 + $0x38] sm:$0xff]
    %v67 = vld [vmem:[#allocation2 + $0x40] sm:$0xff]
    %v68 = vld [vmem:[#allocation2 + $0x48] sm:$0xff]
    %v69 = vld [vmem:[#allocation2 + $0x50] sm:$0xff]
    %v70 = vld [vmem:[#allocation2 + $0x58] sm:$0xff]
    %v71 = vld [vmem:[#allocation2 + $0x60] sm:$0xff]
    %v72 = vld [vmem:[#allocation2 + $0x68] sm:$0xff]
    %v73 = vld [vmem:[#allocation2 + $0x70] sm:$0xff]
    %v74 = vld [vmem:[#allocation2 + $0x78] sm:$0xff]
    %v75 = vld [vmem:[#allocation5] sm:$0xff]
    %v76 = vld [vmem:[#allocation5 + $0x8] sm:$0xff]
    %v77 = vld [vmem:[#allocation5 + $0x10] sm:$0xff]
    %v78 = vld [vmem:[#allocation5 + $0x18] sm:$0xff]
    %v79 = vld [vmem:[#allocation5 + $0x20] sm:$0xff]
    %v80 = vld [vmem:[#allocation5 + $0x28] sm:$0xff]
    %v81 = vld [vmem:[#allocation5 + $0x30] sm:$0xff]
    %v82 = vld [vmem:[#allocation5 + $0x38] sm:$0xff]
    %v83 = vld [vmem:[#allocation5 + $0x40] sm:$0xff]
    %v84 = vld [vmem:[#allocation5 + $0x48] sm:$0xff]
    %v85 = vld [vmem:[#allocation5 + $0x50] sm:$0xff]
    %v86 = vld [vmem:[#allocation5 + $0x58] sm:$0xff]
    %v87 = vld [vmem:[#allocation5 + $0x60] sm:$0xff]
    %v88 = vld [vmem:[#allocation5 + $0x68] sm:$0xff]
    %v89 = vld [vmem:[#allocation5 + $0x70] sm:$0xff]
    %v90 = vld [vmem:[#allocation5 + $0x78] sm:$0xff]
    %v91 = vld [vmem:[%s2] sm:$0x1]
    %v93 = vlaneseq
    %v94 = vshrl.u32 %v93, 7
    %v95 = vsub.s32 0, %v94
    %v96 = vrot.slane %v91, %v95
    %98 = vmatprep.subr.mxu0 0.0
    %99 = vmatpush1.msra.mxu0 %v75
    %100 = vmatprep.subr.mxu0 0.0
    %101 = vmatpush1.msra.mxu0 %v76
    %102 = vmatprep.subr.mxu0 0.0
    %103 = vmatpush1.msra.mxu0 %v77
    %104 = vmatprep.subr.mxu0 0.0
    %105 = vmatpush1.msra.mxu0 %v78
    %106 = vmatprep.subr.mxu0 0.0
    %107 = vmatpush1.msra.mxu0 %v79
    %108 = vmatprep.subr.mxu0 0.0
    %109 = vmatpush1.msra.mxu0 %v80
    %110 = vmatprep.subr.mxu0 0.0
    %111 = vmatpush1.msra.mxu0 %v81
    %112 = vmatprep.subr.mxu0 0.0
    %113 = vmatpush1.msra.mxu0 %v82
    %114 = vmatprep.subr.mxu0 0.0
    %115 = vmatpush1.msra.mxu0 %v83
    %116 = vmatprep.subr.mxu0 0.0
    %117 = vmatpush1.msra.mxu0 %v84
    %118 = vmatprep.subr.mxu0 0.0
    %119 = vmatpush1.msra.mxu0 %v85
    %120 = vmatprep.subr.mxu0 0.0
    %121 = vmatpush1.msra.mxu0 %v86
    %122 = vmatprep.subr.mxu0 0.0
    %123 = vmatpush1.msra.mxu0 %v87
    %124 = vmatprep.subr.mxu0 0.0
    %125 = vmatpush1.msra.mxu0 %v88
    %126 = vmatprep.subr.mxu0 0.0
    %127 = vmatpush1.msra.mxu0 %v89
    %128 = vmatprep.subr.mxu0 0.0
    %129 = vmatpush1.msra.mxu0 %v90
    %130 = vmatprep.subr.mxu0 0.0
    %131 = vmatpush1.msra.mxu0 0.0
    %132 = vmatprep.subr.mxu0 0.0
    %133 = vmatpush1.msra.mxu0 0.0
    %134 = vmatprep.subr.mxu0 0.0
    %135 = vmatpush1.msra.mxu0 0.0
    %136 = vmatprep.subr.mxu0 0.0
    %137 = vmatpush1.msra.mxu0 0.0
    %138 = vmatprep.subr.mxu0 0.0
    %139 = vmatpush1.msra.mxu0 0.0
    %140 = vmatprep.subr.mxu0 0.0
    %141 = vmatpush1.msra.mxu0 0.0
    %142 = vmatprep.subr.mxu0 0.0
    %143 = vmatpush1.msra.mxu0 0.0
    %144 = vmatprep.subr.mxu0 0.0
    %145 = vmatpush1.msra.mxu0 0.0
    %146 = vmatprep.subr.mxu0 0.0
    %147 = vmatpush1.msra.mxu0 0.0
    %148 = vmatprep.subr.mxu0 0.0
    %149 = vmatpush1.msra.mxu0 0.0
    %150 = vmatprep.subr.mxu0 0.0
    %151 = vmatpush1.msra.mxu0 0.0
    %152 = vmatprep.subr.mxu0 0.0
    %153 = vmatpush1.msra.mxu0 0.0
    %154 = vmatprep.subr.mxu0 0.0
    %155 = vmatpush1.msra.mxu0 0.0
    %156 = vmatprep.subr.mxu0 0.0
    %157 = vmatpush1.msra.mxu0 0.0
    %158 = vmatprep.subr.mxu0 0.0
    %159 = vmatpush1.msra.mxu0 0.0
    %160 = vmatprep.subr.mxu0 0.0
    %161 = vmatpush1.msra.mxu0 0.0
    %162 = vmatprep.mubr.f32.mxu0 0.0
    %163 = vmatmul.mubr.f32.gmra.mrb[0].mxu0 %v59
    %v164 = vpop.f32.mrb[0].mxu0
    %v165 = vadd.f32 %v96, %v164
    %v166 = vpop.f32.mrb[0].mxu0
    %167 = vmatprep.mubr.f32.mxu0 0.0
    %168 = vmatmul.mubr.f32.gmra.mrb[0].mxu0 %v60
    %v169 = vpop.f32.mrb[0].mxu0
    %v170 = vadd.f32 %v96, %v169
    %v171 = vpop.f32.mrb[0].mxu0
    %172 = vmatprep.mubr.f32.mxu0 0.0
    %173 = vmatmul.mubr.f32.gmra.mrb[0].mxu0 %v61
    %v174 = vpop.f32.mrb[0].mxu0
    %v175 = vadd.f32 %v96, %v174
    %v176 = vpop.f32.mrb[0].mxu0
    %177 = vmatprep.mubr.f32.mxu0 0.0
    %178 = vmatmul.mubr.f32.gmra.mrb[0].mxu0 %v62
    %v179 = vpop.f32.mrb[0].mxu0
    %v180 = vadd.f32 %v96, %v179
    %v181 = vpop.f32.mrb[0].mxu0
    %182 = vmatprep.mubr.f32.mxu0 0.0
    %183 = vmatmul.mubr.f32.gmra.mrb[0].mxu0 %v63
    %v184 = vpop.f32.mrb[0].mxu0
    %v185 = vadd.f32 %v96, %v184
    %v186 = vpop.f32.mrb[0].mxu0
    %187 = vmatprep.mubr.f32.mxu0 0.0
    %188 = vmatmul.mubr.f32.gmra.mrb[0].mxu0 %v64
    %v189 = vpop.f32.mrb[0].mxu0
    %v190 = vadd.f32 %v96, %v189
    %v191 = vpop.f32.mrb[0].mxu0
    %192 = vmatprep.mubr.f32.mxu0 0.0
    %193 = vmatmul.mubr.f32.gmra.mrb[0].mxu0 %v65
    %v194 = vpop.f32.mrb[0].mxu0
    %v195 = vadd.f32 %v96, %v194
    %v196 = vpop.f32.mrb[0].mxu0
    %197 = vmatprep.mubr.f32.mxu0 0.0
    %198 = vmatmul.mubr.f32.gmra.mrb[0].mxu0 %v66
    %v199 = vpop.f32.mrb[0].mxu0
    %v200 = vadd.f32 %v96, %v199
    %v201 = vpop.f32.mrb[0].mxu0
    %202 = vmatprep.mubr.f32.mxu0 0.0
    %203 = vmatmul.mubr.f32.gmra.mrb[0].mxu0 %v67
    %v204 = vpop.f32.mrb[0].mxu0
    %v205 = vadd.f32 %v96, %v204
    %v206 = vpop.f32.mrb[0].mxu0
    %207 = vmatprep.mubr.f32.mxu0 0.0
    %208 = vmatmul.mubr.f32.gmra.mrb[0].mxu0 %v68
    %v209 = vpop.f32.mrb[0].mxu0
    %v210 = vadd.f32 %v96, %v209
    %v211 = vpop.f32.mrb[0].mxu0
    %212 = vmatprep.mubr.f32.mxu0 0.0
    %213 = vmatmul.mubr.f32.gmra.mrb[0].mxu0 %v69
    %v214 = vpop.f32.mrb[0].mxu0
    %v215 = vadd.f32 %v96, %v214
    %v216 = vpop.f32.mrb[0].mxu0
    %217 = vmatprep.mubr.f32.mxu0 0.0
    %218 = vmatmul.mubr.f32.gmra.mrb[0].mxu0 %v70
    %v219 = vpop.f32.mrb[0].mxu0
    %v220 = vadd.f32 %v96, %v219
    %v221 = vpop.f32.mrb[0].mxu0
    %222 = vmatprep.mubr.f32.mxu0 0.0
    %223 = vmatmul.mubr.f32.gmra.mrb[0].mxu0 %v71
    %v224 = vpop.f32.mrb[0].mxu0
    %v225 = vadd.f32 %v96, %v224
    %v226 = vpop.f32.mrb[0].mxu0
    %227 = vmatprep.mubr.f32.mxu0 0.0
    %228 = vmatmul.mubr.f32.gmra.mrb[0].mxu0 %v72
    %v229 = vpop.f32.mrb[0].mxu0
    %v230 = vadd.f32 %v96, %v229
    %v231 = vpop.f32.mrb[0].mxu0
    %232 = vmatprep.mubr.f32.mxu0 0.0
    %233 = vmatmul.mubr.f32.gmra.mrb[0].mxu0 %v73
    %v234 = vpop.f32.mrb[0].mxu0
    %v235 = vadd.f32 %v96, %v234
    %v236 = vpop.f32.mrb[0].mxu0
    %237 = vmatprep.mubr.f32.mxu0 0.0
    %238 = vmatmul.mubr.f32.gmra.mrb[0].mxu0 %v74
    %v239 = vpop.f32.mrb[0].mxu0
    %v240 = vadd.f32 %v96, %v239
    %v241 = vpop.f32.mrb[0].mxu0
    %242 = vdwg.mxu0
    %v243 = vld [vmem:[#allocation7] sm:$0xff]
    %v244 = vld [vmem:[#allocation7 + $0x8] sm:$0xff]
    %v245 = vld [vmem:[#allocation7 + $0x10] sm:$0xff]
    %v246 = vld [vmem:[#allocation7 + $0x18] sm:$0xff]
    %v247 = vld [vmem:[#allocation7 + $0x20] sm:$0xff]
    %v248 = vld [vmem:[#allocation7 + $0x28] sm:$0xff]
    %v249 = vld [vmem:[#allocation7 + $0x30] sm:$0xff]
    %v250 = vld [vmem:[#allocation7 + $0x38] sm:$0xff]
    %v251 = vld [vmem:[#allocation7 + $0x40] sm:$0xff]
    %v252 = vld [vmem:[#allocation7 + $0x48] sm:$0xff]
    %v253 = vld [vmem:[#allocation7 + $0x50] sm:$0xff]
    %v254 = vld [vmem:[#allocation7 + $0x58] sm:$0xff]
    %v255 = vld [vmem:[#allocation7 + $0x60] sm:$0xff]
    %v256 = vld [vmem:[#allocation7 + $0x68] sm:$0xff]
    %v257 = vld [vmem:[#allocation7 + $0x70] sm:$0xff]
    %v258 = vld [vmem:[#allocation7 + $0x78] sm:$0xff]
    %259 = vmatprep.subr.mxu0 0.0
    %260 = vmatpush1.msra.mxu0 %v165
    %261 = vmatprep.subr.mxu0 0.0
    %262 = vmatpush1.msra.mxu0 %v170
    %263 = vmatprep.subr.mxu0 0.0
    %264 = vmatpush1.msra.mxu0 %v175
    %265 = vmatprep.subr.mxu0 0.0
    %266 = vmatpush1.msra.mxu0 %v180
    %267 = vmatprep.subr.mxu0 0.0
    %268 = vmatpush1.msra.mxu0 %v185
    %269 = vmatprep.subr.mxu0 0.0
    %270 = vmatpush1.msra.mxu0 %v190
    %271 = vmatprep.subr.mxu0 0.0
    %272 = vmatpush1.msra.mxu0 %v195
    %273 = vmatprep.subr.mxu0 0.0
    %274 = vmatpush1.msra.mxu0 %v200
    %275 = vmatprep.subr.mxu0 0.0
    %276 = vmatpush1.msra.mxu0 %v205
    %277 = vmatprep.subr.mxu0 0.0
    %278 = vmatpush1.msra.mxu0 %v210
    %279 = vmatprep.subr.mxu0 0.0
    %280 = vmatpush1.msra.mxu0 %v215
    %281 = vmatprep.subr.mxu0 0.0
    %282 = vmatpush1.msra.mxu0 %v220
    %283 = vmatprep.subr.mxu0 0.0
    %284 = vmatpush1.msra.mxu0 %v225
    %285 = vmatprep.subr.mxu0 0.0
    %286 = vmatpush1.msra.mxu0 %v230
    %287 = vmatprep.subr.mxu0 0.0
    %288 = vmatpush1.msra.mxu0 %v235
    %289 = vmatprep.subr.mxu0 0.0
    %290 = vmatpush1.msra.mxu0 %v240
    %291 = vmatprep.subr.mxu0 0.0
    %292 = vmatpush1.msra.mxu0 0.0
    %293 = vmatprep.subr.mxu0 0.0
    %294 = vmatpush1.msra.mxu0 0.0
    %295 = vmatprep.subr.mxu0 0.0
    %296 = vmatpush1.msra.mxu0 0.0
    %297 = vmatprep.subr.mxu0 0.0
    %298 = vmatpush1.msra.mxu0 0.0
    %299 = vmatprep.subr.mxu0 0.0
    %300 = vmatpush1.msra.mxu0 0.0
    %301 = vmatprep.subr.mxu0 0.0
    %302 = vmatpush1.msra.mxu0 0.0
    %303 = vmatprep.subr.mxu0 0.0
    %304 = vmatpush1.msra.mxu0 0.0
    %305 = vmatprep.subr.mxu0 0.0
    %306 = vmatpush1.msra.mxu0 0.0
    %307 = vmatprep.subr.mxu0 0.0
    %308 = vmatpush1.msra.mxu0 0.0
    %309 = vmatprep.subr.mxu0 0.0
    %310 = vmatpush1.msra.mxu0 0.0
    %311 = vmatprep.subr.mxu0 0.0
    %312 = vmatpush1.msra.mxu0 0.0
    %313 = vmatprep.subr.mxu0 0.0
    %314 = vmatpush1.msra.mxu0 0.0
    %315 = vmatprep.subr.mxu0 0.0
    %316 = vmatpush1.msra.mxu0 0.0
    %317 = vmatprep.subr.mxu0 0.0
    %318 = vmatpush1.msra.mxu0 0.0
    %319 = vmatprep.subr.mxu0 0.0
    %320 = vmatpush1.msra.mxu0 0.0
    %321 = vmatprep.subr.mxu0 0.0
    %322 = vmatpush1.msra.mxu0 0.0
    %323 = vmatprep.mubr.f32.mxu0 0.0
    %324 = vmatmul.mubr.f32.gmra.mrb[0].mxu0 %v243
    %v325 = vpop.f32.mrb[0].mxu0
    %v326 = vadd.f32 0.0, %v325
    %v327 = vpop.f32.mrb[0].mxu0
    %328 = vmatprep.mubr.f32.mxu0 0.0
    %329 = vmatmul.mubr.f32.gmra.mrb[0].mxu0 %v244
    %v330 = vpop.f32.mrb[0].mxu0
    %v331 = vadd.f32 0.0, %v330
    %v332 = vpop.f32.mrb[0].mxu0
    %333 = vmatprep.mubr.f32.mxu0 0.0
    %334 = vmatmul.mubr.f32.gmra.mrb[0].mxu0 %v245
    %v335 = vpop.f32.mrb[0].mxu0
    %v336 = vadd.f32 0.0, %v335
    %v337 = vpop.f32.mrb[0].mxu0
    %338 = vmatprep.mubr.f32.mxu0 0.0
    %339 = vmatmul.mubr.f32.gmra.mrb[0].mxu0 %v246
    %v340 = vpop.f32.mrb[0].mxu0
    %v341 = vadd.f32 0.0, %v340
    %v342 = vpop.f32.mrb[0].mxu0
    %343 = vmatprep.mubr.f32.mxu0 0.0
    %344 = vmatmul.mubr.f32.gmra.mrb[0].mxu0 %v247
    %v345 = vpop.f32.mrb[0].mxu0
    %v346 = vadd.f32 0.0, %v345
    %v347 = vpop.f32.mrb[0].mxu0
    %348 = vmatprep.mubr.f32.mxu0 0.0
    %349 = vmatmul.mubr.f32.gmra.mrb[0].mxu0 %v248
    %v350 = vpop.f32.mrb[0].mxu0
    %v351 = vadd.f32 0.0, %v350
    %v352 = vpop.f32.mrb[0].mxu0
    %353 = vmatprep.mubr.f32.mxu0 0.0
    %354 = vmatmul.mubr.f32.gmra.mrb[0].mxu0 %v249
    %v355 = vpop.f32.mrb[0].mxu0
    %v356 = vadd.f32 0.0, %v355
    %v357 = vpop.f32.mrb[0].mxu0
    %358 = vmatprep.mubr.f32.mxu0 0.0
    %359 = vmatmul.mubr.f32.gmra.mrb[0].mxu0 %v250
    %v360 = vpop.f32.mrb[0].mxu0
    %v361 = vadd.f32 0.0, %v360
    %v362 = vpop.f32.mrb[0].mxu0
    %363 = vmatprep.mubr.f32.mxu0 0.0
    %364 = vmatmul.mubr.f32.gmra.mrb[0].mxu0 %v251
    %v365 = vpop.f32.mrb[0].mxu0
    %v366 = vadd.f32 0.0, %v365
    %v367 = vpop.f32.mrb[0].mxu0
    %368 = vmatprep.mubr.f32.mxu0 0.0
    %369 = vmatmul.mubr.f32.gmra.mrb[0].mxu0 %v252
    %v370 = vpop.f32.mrb[0].mxu0
    %v371 = vadd.f32 0.0, %v370
    %v372 = vpop.f32.mrb[0].mxu0
    %373 = vmatprep.mubr.f32.mxu0 0.0
    %374 = vmatmul.mubr.f32.gmra.mrb[0].mxu0 %v253
    %v375 = vpop.f32.mrb[0].mxu0
    %v376 = vadd.f32 0.0, %v375
    %v377 = vpop.f32.mrb[0].mxu0
    %378 = vmatprep.mubr.f32.mxu0 0.0
    %379 = vmatmul.mubr.f32.gmra.mrb[0].mxu0 %v254
    %v380 = vpop.f32.mrb[0].mxu0
    %v381 = vadd.f32 0.0, %v380
    %v382 = vpop.f32.mrb[0].mxu0
    %383 = vmatprep.mubr.f32.mxu0 0.0
    %384 = vmatmul.mubr.f32.gmra.mrb[0].mxu0 %v255
    %v385 = vpop.f32.mrb[0].mxu0
    %v386 = vadd.f32 0.0, %v385
    %v387 = vpop.f32.mrb[0].mxu0
    %388 = vmatprep.mubr.f32.mxu0 0.0
    %389 = vmatmul.mubr.f32.gmra.mrb[0].mxu0 %v256
    %v390 = vpop.f32.mrb[0].mxu0
    %v391 = vadd.f32 0.0, %v390
    %v392 = vpop.f32.mrb[0].mxu0
    %393 = vmatprep.mubr.f32.mxu0 0.0
    %394 = vmatmul.mubr.f32.gmra.mrb[0].mxu0 %v257
    %v395 = vpop.f32.mrb[0].mxu0
    %v396 = vadd.f32 0.0, %v395
    %v397 = vpop.f32.mrb[0].mxu0
    %398 = vmatprep.mubr.f32.mxu0 0.0
    %399 = vmatmul.mubr.f32.gmra.mrb[0].mxu0 %v258
    %v400 = vpop.f32.mrb[0].mxu0
    %v401 = vadd.f32 0.0, %v400
    %v402 = vpop.f32.mrb[0].mxu0
    %403 = vdwg.mxu0
    %v404 = vmax.f32 %v326, 0.0
    %v405 = vmax.f32 %v331, 0.0
    %v406 = vmax.f32 %v336, 0.0
    %v407 = vmax.f32 %v341, 0.0
    %v408 = vmax.f32 %v346, 0.0
    %v409 = vmax.f32 %v351, 0.0
    %v410 = vmax.f32 %v356, 0.0
    %v411 = vmax.f32 %v361, 0.0
    %v412 = vmax.f32 %v366, 0.0
    %v413 = vmax.f32 %v371, 0.0
    %v414 = vmax.f32 %v376, 0.0
    %v415 = vmax.f32 %v381, 0.0
    %v416 = vmax.f32 %v386, 0.0
    %v417 = vmax.f32 %v391, 0.0
    %v418 = vmax.f32 %v396, 0.0
    %v419 = vmax.f32 %v401, 0.0
    %420 = vst [vmem:[#allocation8] sm:$0xff] %v404
    %421 = vst [vmem:[#allocation8 + $0x8] sm:$0xff] %v405
    %422 = vst [vmem:[#allocation8 + $0x10] sm:$0xff] %v406
    %423 = vst [vmem:[#allocation8 + $0x18] sm:$0xff] %v407
    %424 = vst [vmem:[#allocation8 + $0x20] sm:$0xff] %v408
    %425 = vst [vmem:[#allocation8 + $0x28] sm:$0xff] %v409
    %426 = vst [vmem:[#allocation8 + $0x30] sm:$0xff] %v410
    %427 = vst [vmem:[#allocation8 + $0x38] sm:$0xff] %v411
    %428 = vst [vmem:[#allocation8 + $0x40] sm:$0xff] %v412
    %429 = vst [vmem:[#allocation8 + $0x48] sm:$0xff] %v413
    %430 = vst [vmem:[#allocation8 + $0x50] sm:$0xff] %v414
    %431 = vst [vmem:[#allocation8 + $0x58] sm:$0xff] %v415
    %432 = vst [vmem:[#allocation8 + $0x60] sm:$0xff] %v416
    %433 = vst [vmem:[#allocation8 + $0x68] sm:$0xff] %v417
    %434 = vst [vmem:[#allocation8 + $0x70] sm:$0xff] %v418
    %435 = vst [vmem:[#allocation8 + $0x78] sm:$0xff] %v419
    // Predicated region
    $region30: #{tpu_custom_call.1} parent=1 // pred_check
      _
    $region31: #{tpu_custom_call.1} parent=1 // pred_check_branch
      %437 = sbr.rel (0) target = $region33
    $region32: #{tpu_custom_call.1} parent=1 // pred_region
      %s439 = ssub.s32 2048, 2048
      %440 = vsyncadd [#allocation4], %s439
      %s441 = sshll.u32 [#allocation8], 4
      %s442 = int_to_ptr.vmem [resolvable:$true] %s441
      %447 = dma.vmem_to_hbm [thread:$0]  %s442, 2048, %s4, [#allocation4], 128, 128, 8
    $region33: #{tpu_custom_call.1} parent=1 // pred_fallthru
      _
    // Predicated region
    $region34: #{tpu_custom_call.1} parent=1 // pred_check
      _
    $region35: #{tpu_custom_call.1} parent=1 // pred_check_branch
      %449 = sbr.rel (0) target = $region37
    $region36: #{tpu_custom_call.1} parent=1 // pred_region
      %450 = dma.done [#allocation4], 2048
    $region37: #{tpu_custom_call.1} parent=1 // pred_fallthru
      _
    %451 = vsyncpa [#allocation3], 1
    %452 = vsyncpa [#allocation6], 1
    %453 = vsyncpa [#allocation4], 1

</llo_original>
